<compile_context>
chip_gen: v5e
topology: v5e:2x2
jax: 0.10.0
libtpu: 0.0.40
codegen_flags: <defaults>
</compile_context>

<pallas_src>
import jax
import jax.numpy as jnp
from jax.experimental import pallas as pl
from jax.experimental.pallas import tpu as pltpu


def _time_linear_kernel(w_ref, b_ref, x_ref, o_ref):
    # w_ref: (P, L)  b_ref: (P, 1)  x_ref: (L, TC)  o_ref: (P, TC)
    acc = jnp.dot(w_ref[...], x_ref[...], preferred_element_type=jnp.float32)
    o_ref[...] = (acc + b_ref[...]).astype(o_ref.dtype)


def _channel_tile(C: int) -> int:
    # Full-C block when it comfortably fits VMEM (per-step working set stays far
    # below the 16/32 MiB scoped defaults); otherwise tile in lane-dense
    # multiples of 128 and let Pallas mask the ragged tail tile.
    if C <= 1024:
        return C
    return 512


def model_forward(x_enc, weight, bias):
    """Replicates Model.forward (individual=False).

    x_enc:  (B, seq_len, channels)
    weight: (pred_len, seq_len)   (nn.Linear(seq_len, pred_len).weight)
    bias:   (pred_len,)
    returns (B, pred_len, channels)
    """
    B, L, C = x_enc.shape
    P, L_w = weight.shape
    assert L == L_w, "weight/seq_len mismatch"

    TC = _channel_tile(C)
    n_c = pl.cdiv(C, TC)
    bias2d = bias.reshape(P, 1)  # broadcast over the channel (lane) axis in-kernel

    itemsize = jnp.dtype(x_enc.dtype).itemsize
    cost = pl.CostEstimate(
        flops=2 * B * P * L * C,
        transcendentals=0,
        bytes_accessed=int(
            B * L * C * itemsize          # x in
            + P * L * jnp.dtype(weight.dtype).itemsize
            + P * jnp.dtype(bias.dtype).itemsize
            + B * P * C * itemsize        # y out
        ),
    )

    return pl.pallas_call(
        _time_linear_kernel,
        out_shape=jax.ShapeDtypeStruct((B, P, C), x_enc.dtype),
        grid_spec=pl.GridSpec(
            grid=(B, n_c),
            in_specs=[
                # Weight and bias: one block, VMEM-resident across all steps.
                pl.BlockSpec((P, L), lambda b, c: (0, 0)),
                pl.BlockSpec((P, 1), lambda b, c: (0, 0)),
                # x tile: one batch row, full seq_len, TC channels (lane axis).
                pl.BlockSpec((None, L, TC), lambda b, c: (b, 0, c)),
            ],
            out_specs=pl.BlockSpec((None, P, TC), lambda b, c: (b, 0, c)),
        ),
        compiler_params=pltpu.CompilerParams(
            # Independent output blocks on both axes -> shardable across
            # TensorCores (2x on v7x), plain pipelining on v5e/v6e.
            dimension_semantics=("parallel", "parallel"),
        ),
        cost_estimate=cost,
    )(weight, bias2d, x_enc)


if __name__ == "__main__":
    # Small config consistent with the module: seq_len=8, pred_len=8, enc_in=4.
    B, seq_len, pred_len, channels = 2, 8, 8, 4

    key = jax.random.PRNGKey(0)
    k_x, k_w, k_b = jax.random.split(key, 3)

    x_enc = jax.random.normal(k_x, (B, seq_len, channels), dtype=jnp.float32)
    # Deterministic parameter init (matching nn.Linear(seq_len, pred_len) shapes).
    bound = 1.0 / (seq_len ** 0.5)
    weight = jax.random.uniform(
        k_w, (pred_len, seq_len), minval=-bound, maxval=bound, dtype=jnp.float32
    )
    bias = jax.random.uniform(
        k_b, (pred_len,), minval=-bound, maxval=bound, dtype=jnp.float32
    )

    # Unused in forward (kept for signature parity with the PyTorch module).
    x_mark_enc = jnp.zeros((B, seq_len, 1), dtype=jnp.float32)
    x_dec = jnp.zeros((B, pred_len, channels), dtype=jnp.float32)
    x_mark_dec = jnp.zeros((B, pred_len, 1), dtype=jnp.float32)

    out = jax.block_until_ready(model_forward(x_enc, weight, bias))

    # Cross-check against plain-JAX reference of the same math
    # (== Linear(x.permute(0,2,1)).permute(0,2,1) in the PyTorch module).
    ref = jnp.einsum("pl,blc->bpc", weight, x_enc) + bias[None, :, None]
    assert out.shape == (B, pred_len, channels)
    assert jnp.allclose(out, ref, atol=1e-5, rtol=1e-5)

    print("KERNEL_OK")
</pallas_src>

<mosaic_0001>
module attributes {stable_mosaic.version = 11 : i64} {
  func.func @_time_linear_kernel(%arg0: i32, %arg1: i32, %arg2: memref<8x8xf32, #tpu.memory_space<vmem>>, %arg3: memref<8x1xf32, #tpu.memory_space<vmem>>, %arg4: memref<1x8x4xf32, #tpu.memory_space<vmem>>, %arg5: memref<1x8x4xf32, #tpu.memory_space<vmem>>) attributes {dimension_semantics = [#tpu.dimension_semantics<parallel>, #tpu.dimension_semantics<parallel>], iteration_bounds = array<i64: 2, 1>, scalar_prefetch = 0 : i64, scratch_operands = 0 : i64, tpu.core_type = #tpu.core_type<tc>, window_params = [{pipeline_mode = #tpu.pipeline_mode<synchronous>, transform_indices = @transform_0, window_bounds = array<i64: 8, 8>}, {pipeline_mode = #tpu.pipeline_mode<synchronous>, transform_indices = @transform_1, window_bounds = array<i64: 8, 1>}, {transform_indices = @transform_2, window_bounds = array<i64: 1, 8, 4>}, {transform_indices = @transform_3, window_bounds = array<i64: 1, 8, 4>}]} {
    %c0 = arith.constant 0 : index
    %c0_0 = arith.constant 0 : index
    %0 = vector.load %arg2[%c0, %c0_0] : memref<8x8xf32, #tpu.memory_space<vmem>>, vector<8x8xf32>
    %c0_1 = arith.constant 0 : index
    %c0_2 = arith.constant 0 : index
    %c0_3 = arith.constant 0 : index
    %1 = vector.load %arg4[%c0_1, %c0_2, %c0_3] : memref<1x8x4xf32, #tpu.memory_space<vmem>>, vector<1x8x4xf32>
    %2 = vector.shape_cast %1 : vector<1x8x4xf32> to vector<8x4xf32>
    %cst = arith.constant dense<0.000000e+00> : vector<8x4xf32>
    %3 = tpu.matmul %0, %2, %cst {dimension_numbers = #tpu.dot_dimension_numbers<[1], [0], [0], [1], [0, 0, 1, 1], [], []>} : vector<8x8xf32>, vector<8x4xf32>, vector<8x4xf32> -> vector<8x4xf32>
    %c0_4 = arith.constant 0 : index
    %c0_5 = arith.constant 0 : index
    %4 = vector.load %arg3[%c0_4, %c0_5] : memref<8x1xf32, #tpu.memory_space<vmem>>, vector<8x1xf32>
    %5 = vector.broadcast %4 : vector<8x1xf32> to vector<8x4xf32>
    %6 = arith.addf %3, %5 : vector<8x4xf32>
    %c0_6 = arith.constant 0 : index
    %c0_7 = arith.constant 0 : index
    %c0_8 = arith.constant 0 : index
    %7 = vector.load %arg5[%c0_6, %c0_7, %c0_8] : memref<1x8x4xf32, #tpu.memory_space<vmem>>, vector<1x8x4xf32>
    %8 = vector.shape_cast %7 : vector<1x8x4xf32> to vector<8x4xf32>
    %9 = vector.shape_cast %6 : vector<8x4xf32> to vector<1x8x4xf32>
    tpu.vector_store %arg5[%c0_6, %c0_7, %c0_8], %9 {strides = array<i32>} : memref<1x8x4xf32, #tpu.memory_space<vmem>>, vector<1x8x4xf32>,
    return
  }
  func.func @transform_0(%arg0: i32, %arg1: i32) -> (i32, i32) {
    %c0_i32 = arith.constant 0 : i32
    %c0_i32_0 = arith.constant 0 : i32
    %c0_i32_1 = arith.constant 0 : i32
    return %c0_i32, %c0_i32_0 : i32, i32
  }
  func.func @transform_1(%arg0: i32, %arg1: i32) -> (i32, i32) {
    %c0_i32 = arith.constant 0 : i32
    %c0_i32_0 = arith.constant 0 : i32
    %c0_i32_1 = arith.constant 0 : i32
    return %c0_i32, %c0_i32_0 : i32, i32
  }
  func.func @transform_2(%arg0: i32, %arg1: i32) -> (i32, i32, i32) {
    %c0_i32 = arith.constant 0 : i32
    %c0_i32_0 = arith.constant 0 : i32
    return %arg0, %c0_i32, %arg1 : i32, i32, i32
  }
  func.func @transform_3(%arg0: i32, %arg1: i32) -> (i32, i32, i32) {
    %c0_i32 = arith.constant 0 : i32
    %c0_i32_0 = arith.constant 0 : i32
    return %arg0, %c0_i32, %arg1 : i32, i32, i32
  }
}

</mosaic_0001>

<llo_original>
// kernel: tpu_custom_call.1
$region0: #{tpu_custom_call.1}
  #allocation0 [shape = 'u32[]', space=smem, size = 0x4, offset = 0x4, fixed_abs, tag = 'smem constant byte address 0x4 - core index']
  #allocation1 [shape = 'u32[72,128]{1,0:T(1,128)}', space=vmem, size = 0x9000, scoped, tag = 'internal scratch']
  %s0 = inlined_call_operand.vmem [shape: f32[8,8], index: 0, kind: input, shape index: {}]
  %s1 = inlined_call_operand.vmem [shape: f32[8,1], index: 1, kind: input, shape index: {}]
  %s2 = inlined_call_operand.vmem [shape: f32[2,8,4], index: 2, kind: input, shape index: {}]
  %s3 = inlined_call_operand.vmem [shape: f32[2,8,4], index: 3, kind: output, shape index: {}]
  %s4 = sld [smem:[#allocation0]]
  $region45: #{tpu_custom_call.1} parent=0
    _
  %s6 = ssub.s32 1, %s4
  %s7 = scalar_select 0, %s6, %s4
  loop: start=0, step=1, limit=4
  $region2: #{tpu_custom_call.1} parent=0 // loop_pre_header
    _
  $region3: #{tpu_custom_call.1} parent=0 // loop_header
    %s9 = sphi 0, %s13
    %p10 = scmp.ge.s32.totalorder %s9, 4
    %s16 = sphi 0, %s28
    %s17 = sphi 0, %s24
    %s18 = sphi 0, %s16
    %s19 = sphi 0, %s17
    %s20 = sphi 0, %s18
    %s21 = sphi 0, %s19
    %s29 = sphi 0, %s29
    %s31 = sphi 0, %s29
    %s32 = sphi 0, %s31
    %s46 = sphi 0, %s32
    %s50 = sphi 0, %s50
    %s52 = sphi 0, %s50
    %s53 = sphi 0, %s52
    %s67 = sphi 0, %s53
    %s75 = sphi 0, %s77
    %s78 = sphi 0, %s75
    %s79 = sphi 0, %s78
    %s95 = sphi 0, %s79
    %s103 = sphi 0, %s105
    %s106 = sphi 0, %s103
    %s107 = sphi 0, %s106
    %s123 = sphi 0, %s107
  $region4: #{tpu_custom_call.1} parent=0 // loop_header_branch
    %12 = sbr.rel (%p10) target = $region8
  $region5: #{tpu_custom_call.1} parent=0 // loop_body
    %s14 = ssub.s32 %s9, 1
    %s15 = ssub.s32 %s9, 2
    %s22 = sadd.s32 1, %s17
    %p23 = scmp.ge.s32.totalorder %s22, 1
    %s24 = scalar_select %p23, 0, %s22
    %s25 = sadd.s32 1, %s16
    %s26 = scalar_select %p23, %s25, %s16
    %p27 = scmp.ge.s32.totalorder %s26, 2
    %s28 = scalar_select %p27, 0, %s26
    %s30 = sadd.s32 %s29, 1
    %p33 = scmp.eq.s32.totalorder %s9, 1
    %p34 = scmp.ne.s32.totalorder %s29, %s31
    %p35 = scmp.eq.s32.totalorder %s9, 0
    %p36 = por %p34, %p35
    %p37 = scmp.ne.s32.totalorder %s29, %s31
    %p38 = scmp.eq.s32.totalorder %s14, 1
    %p39 = por %p37, %p38
    %p40 = scmp.ne.s32.totalorder %s31, %s32
    %p41 = scmp.eq.s32.totalorder %s14, 0
    %p42 = por %p40, %p41
    %p43 = scmp.ne.s32.totalorder %s31, %s32
    %p44 = scmp.eq.s32.totalorder %s15, 1
    %p45 = por %p43, %p44
    %p47 = scmp.ne.s32.totalorder %s32, %s46
    %p48 = scmp.eq.s32.totalorder %s15, 0
    %p49 = por %p47, %p48
    %s51 = sadd.s32 %s50, 1
    %p54 = scmp.eq.s32.totalorder %s9, 1
    %p55 = scmp.ne.s32.totalorder %s50, %s52
    %p56 = scmp.eq.s32.totalorder %s9, 0
    %p57 = por %p55, %p56
    %p58 = scmp.ne.s32.totalorder %s50, %s52
    %p59 = scmp.eq.s32.totalorder %s14, 1
    %p60 = por %p58, %p59
    %p61 = scmp.ne.s32.totalorder %s52, %s53
    %p62 = scmp.eq.s32.totalorder %s14, 0
    %p63 = por %p61, %p62
    %p64 = scmp.ne.s32.totalorder %s52, %s53
    %p65 = scmp.eq.s32.totalorder %s15, 1
    %p66 = por %p64, %p65
    %p68 = scmp.ne.s32.totalorder %s53, %s67
    %p69 = scmp.eq.s32.totalorder %s15, 0
    %p70 = por %p68, %p69
    %s71 = ssub.s32 %s16, %s28
    %s72 = ssub.s32 %s17, %s24
    %s73 = sor.u32 %s71, %s72
    %p74 = scmp.eq.s32.totalorder %s73, 0
    %s76 = sadd.s32 %s75, 1
    %s77 = scalar_select %p74, %s75, %s76
    %p80 = pneg %p74
    %p81 = scmp.eq.s32.totalorder %s9, 1
    %p82 = por %p80, %p81
    %p83 = scmp.ne.s32.totalorder %s75, %s78
    %p84 = scmp.eq.s32.totalorder %s9, 0
    %p85 = por %p83, %p84
    %p86 = scmp.ne.s32.totalorder %s75, %s78
    %p87 = scmp.eq.s32.totalorder %s14, 1
    %p88 = por %p86, %p87
    %p89 = scmp.ne.s32.totalorder %s78, %s79
    %p90 = scmp.eq.s32.totalorder %s14, 0
    %p91 = por %p89, %p90
    %p92 = scmp.ne.s32.totalorder %s78, %s79
    %p93 = scmp.eq.s32.totalorder %s15, 1
    %p94 = por %p92, %p93
    %p96 = scmp.ne.s32.totalorder %s79, %s95
    %p97 = scmp.eq.s32.totalorder %s15, 0
    %p98 = por %p96, %p97
    %s99 = ssub.s32 %s16, %s28
    %s100 = ssub.s32 %s17, %s24
    %s101 = sor.u32 %s99, %s100
    %p102 = scmp.eq.s32.totalorder %s101, 0
    %s104 = sadd.s32 %s103, 1
    %s105 = scalar_select %p102, %s103, %s104
    %p108 = pneg %p102
    %p109 = scmp.eq.s32.totalorder %s9, 1
    %p110 = por %p108, %p109
    %p111 = scmp.ne.s32.totalorder %s103, %s106
    %p112 = scmp.eq.s32.totalorder %s9, 0
    %p113 = por %p111, %p112
    %p114 = scmp.ne.s32.totalorder %s103, %s106
    %p115 = scmp.eq.s32.totalorder %s14, 1
    %p116 = por %p114, %p115
    %p117 = scmp.ne.s32.totalorder %s106, %s107
    %p118 = scmp.eq.s32.totalorder %s14, 0
    %p119 = por %p117, %p118
    %p120 = scmp.ne.s32.totalorder %s106, %s107
    %p121 = scmp.eq.s32.totalorder %s15, 1
    %p122 = por %p120, %p121
    %p124 = scmp.ne.s32.totalorder %s107, %s123
    %p125 = scmp.eq.s32.totalorder %s15, 0
    %p126 = por %p124, %p125
    %p127 = scmp.le.s32.totalorder 1, %s9
    %p128 = scmp.lt.s32.totalorder %s9, 3
    %p129 = pnand %p127, %p128
    %p130 = pneg %p129
    // Predicated region
    $region9: #{tpu_custom_call.1} parent=5 // pred_check
      _
    $region10: #{tpu_custom_call.1} parent=5 // pred_check_branch
      %132 = sbr.rel (%p129) target = $region12
    $region11: #{tpu_custom_call.1} parent=5 // pred_region
      %s133 = ssub.s32 %s9, 1
      // Predicated region
      $region13: #{tpu_custom_call.1} parent=11 // pred_check
        %p134 = pneg %p42
      $region14: #{tpu_custom_call.1} parent=11 // pred_check_branch
        %136 = sbr.rel (%p134) target = $region16
      $region15: #{tpu_custom_call.1} parent=11 // pred_region
        _
      $region16: #{tpu_custom_call.1} parent=11 // pred_fallthru
        _
      // Predicated region
      $region17: #{tpu_custom_call.1} parent=11 // pred_check
        %p137 = pneg %p63
      $region18: #{tpu_custom_call.1} parent=11 // pred_check_branch
        %139 = sbr.rel (%p137) target = $region20
      $region19: #{tpu_custom_call.1} parent=11 // pred_region
        _
      $region20: #{tpu_custom_call.1} parent=11 // pred_fallthru
        _
    $region12: #{tpu_custom_call.1} parent=5 // pred_fallthru
      _
    %p140 = scmp.lt.s32.totalorder %s9, 2
    // Predicated region
    $region21: #{tpu_custom_call.1} parent=5 // pred_check
      %p141 = pneg %p140
    $region22: #{tpu_custom_call.1} parent=5 // pred_check_branch
      %143 = sbr.rel (%p141) target = $region24
    $region23: #{tpu_custom_call.1} parent=5 // pred_region
      // Predicated region
      $region25: #{tpu_custom_call.1} parent=23 // pred_check
        %p144 = pneg %p85
      $region26: #{tpu_custom_call.1} parent=23 // pred_check_branch
        %146 = sbr.rel (%p144) target = $region28
      $region27: #{tpu_custom_call.1} parent=23 // pred_region
        %p147 = scmp.lt.s32.totalorder %s16, 1
        %s148 = scalar_select %p147, %s16, 1
        %p149 = scmp.lt.s32.totalorder %s17, 0
        %s150 = scalar_select %p149, %s17, 0
        %s151 = sadd.s32 %s150, %s148
        %s152 = smul.addr %s151, 8
        %s153 = scalar_lea.vmem %s2, %s152
      $region28: #{tpu_custom_call.1} parent=23 // pred_fallthru
        _
    $region24: #{tpu_custom_call.1} parent=5 // pred_fallthru
      _
    %p154 = scmp.le.s32.totalorder 1, %s9
    %p155 = scmp.lt.s32.totalorder %s9, 3
    %p156 = pnand %p154, %p155
    %p157 = pneg %p156
    // Predicated region
    $region29: #{tpu_custom_call.1} parent=5 // pred_check
      _
    $region30: #{tpu_custom_call.1} parent=5 // pred_check_branch
      %159 = sbr.rel (%p156) target = $region32
    $region31: #{tpu_custom_call.1} parent=5 // pred_region
      %s160 = ssub.s32 %s9, 1
      %p161 = pneg %p42
      %p162 = pneg %p39
      %p163 = pneg %p63
      %p164 = pneg %p60
      %p165 = scmp.lt.s32.totalorder %s18, 1
      %s166 = scalar_select %p165, %s18, 1
      %p167 = scmp.lt.s32.totalorder %s19, 0
      %s168 = scalar_select %p167, %s19, 0
      %s169 = sadd.s32 %s168, %s166
      %s170 = smul.addr %s169, 8
      %s171 = scalar_lea.vmem %s2, %s170
      %p172 = pneg %p91
      %p173 = pneg %p88
      %p174 = pneg %p119
      %p175 = pneg %p116
      %p176 = scmp.lt.s32.totalorder %s18, 1
      %s177 = scalar_select %p176, %s18, 1
      %p178 = scmp.lt.s32.totalorder %s19, 0
      %s179 = scalar_select %p178, %s19, 0
      %s180 = sadd.s32 %s179, %s177
      %s181 = smul.addr %s180, 8
      %s182 = scalar_lea.vmem %s3, %s181
      %p183 = scmp.lt.s32.totalorder %s18, 1
      %s184 = scalar_select %p183, %s18, 1
      %p185 = scmp.lt.s32.totalorder %s19, 0
      %s186 = scalar_select %p185, %s19, 0
      %s187 = sadd.s32 %s186, %s184
      %s188 = smul.addr %s187, 8
      %s189 = scalar_lea.vmem %s2, %s188
      %p190 = scmp.lt.s32.totalorder %s18, 1
      %s191 = scalar_select %p190, %s18, 1
      %p192 = scmp.lt.s32.totalorder %s19, 0
      %s193 = scalar_select %p192, %s19, 0
      %s194 = sadd.s32 %s193, %s191
      %s195 = smul.addr %s194, 8
      %s196 = scalar_lea.vmem %s3, %s195
      %v197 = vld [vmem:[%s0] sm:$0xff]
      %v198 = vld [vmem:[%s189] sm:$0xff]
      %v199 = vld [vmem:[%s1] sm:$0xff]
      %201 = vset.pattern.permute.xlu0 0
      %202 = vperm.xlu0 %201, %v199
      %v203 = vpop.permute.xlu0 %202
      %vm205 = vcmask 64512
      %v207 = vsel %vm205, %v197, 0
      %209 = vmatpush.msra.mxu0 0.0
      %210 = vmatpush.msra.mxu0 0.0
      %211 = vmatpush.msra.mxu0 0.0
      %212 = vmatpush.msra.mxu0 0.0
      %213 = vmatpush.msra.mxu0 0.0
      %214 = vmatpush.msra.mxu0 0.0
      %215 = vmatpush.msra.mxu0 0.0
      %216 = vmatpush.msra.mxu0 0.0
      %217 = vmatpush.msra.mxu0 0.0
      %218 = vmatpush.msra.mxu0 0.0
      %219 = vmatpush.msra.mxu0 0.0
      %220 = vmatpush.msra.mxu0 0.0
      %221 = vmatpush.msra.mxu0 0.0
      %222 = vmatpush.msra.mxu0 0.0
      %223 = vmatpush.msra.mxu0 0.0
      %224 = vmatpush.msra.mxu0 %v198
      %225 = vmatmul.f32.gmra.mxu0 %v207
      %v226 = vpop.f32.mrf.mxu0
      %v227 = vadd.f32 %v203, %v226
      %228 = vdwg.mxu0
      %vm229 = vcmask 31744
      %230 = vst.msk [vmem:[%s196] sm:$0xff] %vm229, %v227
      %p231 = scmp.lt.s32.totalorder %s18, 1
      %s232 = scalar_select %p231, %s18, 1
      %p233 = scmp.lt.s32.totalorder %s19, 0
      %s234 = scalar_select %p233, %s19, 0
      %s235 = sadd.s32 %s234, %s232
      %s236 = smul.addr %s235, 8
      %s237 = scalar_lea.vmem %s3, %s236
      // Predicated region
      $region33: #{tpu_custom_call.1} parent=31 // pred_check
        %p238 = pneg %p116
      $region34: #{tpu_custom_call.1} parent=31 // pred_check_branch
        %240 = sbr.rel (%p238) target = $region36
      $region35: #{tpu_custom_call.1} parent=31 // pred_region
        _
      $region36: #{tpu_custom_call.1} parent=31 // pred_fallthru
        _
    $region32: #{tpu_custom_call.1} parent=5 // pred_fallthru
      _
    %p241 = scmp.le.s32.totalorder 2, %s9
    // Predicated region
    $region37: #{tpu_custom_call.1} parent=5 // pred_check
      %p242 = pneg %p241
    $region38: #{tpu_custom_call.1} parent=5 // pred_check_branch
      %244 = sbr.rel (%p242) target = $region40
    $region39: #{tpu_custom_call.1} parent=5 // pred_region
      %s245 = ssub.s32 %s9, 2
      // Predicated region
      $region41: #{tpu_custom_call.1} parent=39 // pred_check
        %p246 = pneg %p122
      $region42: #{tpu_custom_call.1} parent=39 // pred_check_branch
        %248 = sbr.rel (%p246) target = $region44
      $region43: #{tpu_custom_call.1} parent=39 // pred_region
        %p249 = scmp.lt.s32.totalorder %s20, 1
        %s250 = scalar_select %p249, %s20, 1
        %p251 = scmp.lt.s32.totalorder %s21, 0
        %s252 = scalar_select %p251, %s21, 0
        %s253 = sadd.s32 %s252, %s250
        %s254 = smul.addr %s253, 8
        %s255 = scalar_lea.vmem %s3, %s254
      $region44: #{tpu_custom_call.1} parent=39 // pred_fallthru
        _
    $region40: #{tpu_custom_call.1} parent=5 // pred_fallthru
      _
  $region6: #{tpu_custom_call.1} parent=0 // loop_footer
    %s13 = sadd.s32 1, %s9
  $region7: #{tpu_custom_call.1} parent=0 // loop_footer_branch
    %8 = sbr.rel target = $region3
  $region8: #{tpu_custom_call.1} parent=0 // loop_exit
    _

</llo_original>
